<compile_context>
chip_gen: v7x
topology: tpu7x:2x2x1
jax: 0.10.0
libtpu: 0.0.40
codegen_flags: <defaults>
</compile_context>

<pallas_src>
import math

import numpy as np
import jax
import jax.numpy as jnp
from jax.experimental import pallas as pl
from jax.experimental.pallas import tpu as pltpu


def _round_up(a, b):
    return ((a + b - 1) // b) * b


def _hw_defaults():
    """Best-effort generation-aware defaults: (mxu_width, vmem_limit_bytes)."""
    mxu_n = 256                         # v6e / v7x MXU is 256 wide
    vmem_limit = 48 * 1024 * 1024       # conservative fallback (fits v7x 64 MiB)
    try:
        cap = pltpu.get_tpu_info().vmem_capacity_bytes
        vmem_limit = int(min(max(cap - 16 * 1024 * 1024, 32 * 1024 * 1024),
                             96 * 1024 * 1024))
    except Exception:
        pass
    try:
        if "v5" in jax.devices()[0].device_kind.lower():
            mxu_n = 128                 # v5e MXU is 128 wide; 128-pad is enough
    except Exception:
        pass
    return mxu_n, vmem_limit


# ----------------------------- Pallas kernel -------------------------------

def _fused_head_kernel(x_ref, w1_ref, b1_ref, w2_ref, b2_ref, o_ref):
    # folded (backbone + pool + flatten + fc1) -> ReLU -> fc2, all in VMEM.
    x = x_ref[...].astype(jnp.bfloat16)          # in-kernel cast: no extra HBM pass
    h = jnp.dot(x, w1_ref[...], preferred_element_type=jnp.float32)
    h = jnp.maximum(h + b1_ref[...], 0.0)        # bias + ReLU in f32 (VPU-safe on v5e)
    o = jnp.dot(h.astype(w2_ref.dtype), w2_ref[...],
                preferred_element_type=jnp.float32) + b2_ref[...]
    o_ref[...] = o.astype(o_ref.dtype)


def fused_forward(x_flat, w1, b1, w2, b2, *, block_m=512,
                  out_dtype=jnp.float32, vmem_limit_bytes=48 * 1024 * 1024):
    """x_flat: (M, F) f32 raw NCHW flatten; w1: (F, Hp) bf16; b1: (1, Hp) f32;
       w2: (Hp, Op) bf16; b2: (1, Op) f32  ->  (M, Op) out_dtype."""
    M, F = x_flat.shape
    Hp = w1.shape[1]
    Op = w2.shape[1]

    if M <= 8:
        tm = M                                   # single full-dim block
    else:
        # >= 2 grid steps so the "parallel" M axis can use both v7x TensorCores.
        tm = min(block_m, max(8, _round_up(pl.cdiv(M, 2), 8)))
    M_pad = _round_up(M, tm)
    if M_pad != M:
        # pad rows so every output tile is a full, unmasked store
        x_flat = jnp.pad(x_flat, ((0, M_pad - M), (0, 0)))
    grid = (M_pad // tm,)

    cost = pl.CostEstimate(
        flops=2 * M_pad * (F * Hp + Hp * Op),
        transcendentals=0,
        bytes_accessed=(M_pad * F * x_flat.dtype.itemsize
                        + w1.size * 2 + b1.size * 4 + w2.size * 2 + b2.size * 4
                        + M_pad * Op * np.dtype(out_dtype).itemsize),
    )

    out = pl.pallas_call(
        _fused_head_kernel,
        out_shape=jax.ShapeDtypeStruct((M_pad, Op), out_dtype),
        grid=grid,
        in_specs=[
            pl.BlockSpec((tm, F), lambda i: (i, 0)),
            # TODO(synk): for a real backbone (F in the thousands) K-tile this
            # reduction ("arbitrary" axis + f32 VMEM accumulator) and
            # single-buffer the weight slabs to respect v7x's 64 MiB VMEM.
            pl.BlockSpec((F, Hp), lambda i: (0, 0)),
            pl.BlockSpec((1, Hp), lambda i: (0, 0)),
            pl.BlockSpec((Hp, Op), lambda i: (0, 0)),
            pl.BlockSpec((1, Op), lambda i: (0, 0)),
        ],
        out_specs=pl.BlockSpec((tm, Op), lambda i: (i, 0)),
        compiler_params=pltpu.CompilerParams(
            dimension_semantics=("parallel",),   # shard M over v7x's 2 TCs
            vmem_limit_bytes=int(vmem_limit_bytes),
        ),
        cost_estimate=cost,
    )(x_flat, w1, b1, w2, b2)
    return out[:M] if M_pad != M else out


# ------------------------------- Model glue --------------------------------

class ClassificationNetPallas:
    """JAX/Pallas re-implementation of ClassificationNet.forward."""

    def __init__(self, input_shape, anchors, classes, pool_channels,
                 fc_hidden_size, backbone_out_channels=8, reduction_factor=4,
                 out_dtype=jnp.float32, key=jax.random.PRNGKey(0)):
        C_in, H, W = input_shape
        self.reduction_factor = reduction_factor
        Hr = math.ceil(H / reduction_factor)
        Wr = math.ceil(W / reduction_factor)
        self.Hr, self.Wr = Hr, Wr
        S = Hr * Wr
        flat = pool_channels * S
        out_dim = anchors * (classes + 1) * 2
        self.out_dim = out_dim
        self.pool_channels = pool_channels
        self.out_dtype = out_dtype

        mxu_n, self.vmem_limit = _hw_defaults()

        k = jax.random.split(key, 8)
        s = 0.1
        # raw (PyTorch-equivalent) parameters, kept in f32 for the reference
        w_bb = (s * jax.random.normal(k[0], (C_in, backbone_out_channels))).astype(jnp.float32)
        b_bb = (s * jax.random.normal(k[1], (backbone_out_channels,))).astype(jnp.float32)
        w_pool = (s * jax.random.normal(k[2], (backbone_out_channels, pool_channels))).astype(jnp.float32)
        b_pool = (s * jax.random.normal(k[3], (pool_channels,))).astype(jnp.float32)
        w_fc1 = (s * jax.random.normal(k[4], (flat, fc_hidden_size))).astype(jnp.float32)
        b_fc1 = (s * jax.random.normal(k[5], (fc_hidden_size,))).astype(jnp.float32)
        w_fc2 = (s * jax.random.normal(k[6], (fc_hidden_size, out_dim))).astype(jnp.float32)
        b_fc2 = (s * jax.random.normal(k[7], (out_dim,))).astype(jnp.float32)
        self.raw = dict(w_bb=w_bb, b_bb=b_bb, w_pool=w_pool, b_pool=b_pool,
                        w_fc1=w_fc1, b_fc1=b_fc1, w_fc2=w_fc2, b_fc2=b_fc2)

        # ---- one-time weight folding (everything before ReLU is linear) ----
        # (1) backbone 1x1 projection then pool 1x1:  (C_in, P)
        w_cp = w_bb @ w_pool
        b_cp = b_bb @ w_pool + b_pool
        # (2) fold channel projection + PyTorch channel-major flatten (p*S + s,
        #     s = hr*Wr + wr) into fc1.
        w1_3d = w_fc1.reshape(pool_channels, S, fc_hidden_size)          # [p, s, j]
        w1_scj = jnp.einsum('cp,psj->scj', w_cp, w1_3d)                  # [s, c, j]
        b1_eff = b_fc1 + jnp.einsum('p,psj->j', b_cp, w1_3d)
        # (3) fold the stride-R spatial selection + row-major NCHW flatten:
        #     scatter into a (C, H, W, J) slab so the kernel consumes the raw
        #     x.reshape(N, C*H*W) directly (no subsample/transpose HBM passes).
        w1_chwj = jnp.transpose(w1_scj.reshape(Hr, Wr, C_in, fc_hidden_size),
                                (2, 0, 1, 3))                            # [c, hr, wr, j]
        R = reduction_factor
        w1_full = jnp.zeros((C_in, H, W, fc_hidden_size), jnp.float32)
        w1_full = w1_full.at[:, ::R, ::R, :].set(w1_chwj)
        w1_full = w1_full.reshape(C_in * H * W, fc_hidden_size)

        # (4) zero-pad hidden / output dims to lane-dense MXU-friendly widths
        #     (exact: ReLU(0)=0, matching zero rows/cols of w2 contribute 0).
        Hp = max(_round_up(fc_hidden_size, 128), mxu_n)
        Op = _round_up(out_dim, 128)
        self.Hp, self.Op = Hp, Op
        w1_pad = jnp.zeros((C_in * H * W, Hp), jnp.float32).at[:, :fc_hidden_size].set(w1_full)
        b1_pad = jnp.zeros((Hp,), jnp.float32).at[:fc_hidden_size].set(b1_eff)
        w2_pad = jnp.zeros((Hp, Op), jnp.float32).at[:fc_hidden_size, :out_dim].set(w_fc2)
        b2_pad = jnp.zeros((Op,), jnp.float32).at[:out_dim].set(b_fc2)

        # bf16 MXU operands, f32 biases
        self.w1 = w1_pad.astype(jnp.bfloat16)
        self.b1 = b1_pad.reshape(1, Hp).astype(jnp.float32)
        self.w2 = w2_pad.astype(jnp.bfloat16)
        self.b2 = b2_pad.reshape(1, Op).astype(jnp.float32)

        self._fwd = jax.jit(self._forward)

    def _forward(self, x_nchw):
        N = x_nchw.shape[0]
        # Only a free row-major flatten: the stride-R subsample, channels-last
        # permutation and channel projection are folded into w1; the f32->bf16
        # cast happens in-kernel.  x is read from HBM exactly once.
        x_flat = x_nchw.reshape(N, -1)
        out = fused_forward(x_flat, self.w1, self.b1, self.w2, self.b2,
                            out_dtype=self.out_dtype,
                            vmem_limit_bytes=self.vmem_limit)
        return out[:, :self.out_dim].astype(jnp.float32)

    def __call__(self, x_nchw):
        return self._fwd(x_nchw)

    def reference(self, x_nchw):
        """Unfolded f32 op-by-op reference of the original forward semantics."""
        p = self.raw
        N = x_nchw.shape[0]
        R = self.reduction_factor
        Hr, Wr = self.Hr, self.Wr
        xs = jnp.transpose(x_nchw[:, :, ::R, ::R], (0, 2, 3, 1)).reshape(N * Hr * Wr, -1)
        feat = xs @ p['w_bb'] + p['b_bb']
        pooled = feat @ p['w_pool'] + p['b_pool']
        pooled = jnp.transpose(pooled.reshape(N, Hr, Wr, self.pool_channels), (0, 3, 1, 2))
        fea = pooled.reshape(N, -1)                      # PyTorch (c, h, w) flatten
        hid = jnp.maximum(fea @ p['w_fc1'] + p['b_fc1'], 0.0)
        return hid @ p['w_fc2'] + p['b_fc2']


# ---------------------------------- main ------------------------------------

if __name__ == "__main__":
    batch = 2
    input_shape = (3, 16, 16)   # (C, H, W), NCHW input
    anchors, classes = 2, 3
    pool_channels = 4
    fc_hidden_size = 32

    model = ClassificationNetPallas(
        input_shape=input_shape,
        anchors=anchors,
        classes=classes,
        pool_channels=pool_channels,
        fc_hidden_size=fc_hidden_size,
        backbone_out_channels=8,
        reduction_factor=4,
        out_dtype=jnp.float32,     # use jnp.bfloat16 on v5e to halve the writeback
        key=jax.random.PRNGKey(0),
    )

    x = jax.random.normal(
        jax.random.PRNGKey(0), (batch,) + input_shape, dtype=jnp.float32
    )

    out = jax.block_until_ready(model(x))
    expected = (batch, anchors * (classes + 1) * 2)
    assert out.shape == expected, (out.shape, expected)

    # validate the weight folds + bf16 cast against the unfolded f32 reference
    ref = model.reference(x)
    max_err = float(jnp.max(jnp.abs(out.astype(jnp.float32) - ref)))
    assert max_err < 2e-2, f"max abs err {max_err}"

    print("KERNEL_OK")
</pallas_src>

<mosaic_0001>
module attributes {stable_mosaic.version = 11 : i64} {
  func.func @_fused_head_kernel(%arg0: i32, %arg1: memref<2x768xf32, #tpu.memory_space<vmem>>, %arg2: memref<768x256xbf16, #tpu.memory_space<vmem>>, %arg3: memref<1x256xf32, #tpu.memory_space<vmem>>, %arg4: memref<256x128xbf16, #tpu.memory_space<vmem>>, %arg5: memref<1x128xf32, #tpu.memory_space<vmem>>, %arg6: memref<2x128xf32, #tpu.memory_space<vmem>>) attributes {dimension_semantics = [#tpu.dimension_semantics<parallel>], iteration_bounds = array<i64: 1>, scalar_prefetch = 0 : i64, scratch_operands = 0 : i64, tpu.core_type = #tpu.core_type<tc>, window_params = [{transform_indices = @transform_0, window_bounds = array<i64: 2, 768>}, {pipeline_mode = #tpu.pipeline_mode<synchronous>, transform_indices = @transform_1, window_bounds = array<i64: 768, 256>}, {pipeline_mode = #tpu.pipeline_mode<synchronous>, transform_indices = @transform_2, window_bounds = array<i64: 1, 256>}, {pipeline_mode = #tpu.pipeline_mode<synchronous>, transform_indices = @transform_3, window_bounds = array<i64: 256, 128>}, {pipeline_mode = #tpu.pipeline_mode<synchronous>, transform_indices = @transform_4, window_bounds = array<i64: 1, 128>}, {transform_indices = @transform_5, window_bounds = array<i64: 2, 128>}]} {
    %c0 = arith.constant 0 : index
    %c0_0 = arith.constant 0 : index
    %0 = vector.load %arg1[%c0, %c0_0] : memref<2x768xf32, #tpu.memory_space<vmem>>, vector<2x768xf32>
    %1 = arith.truncf %0 : vector<2x768xf32> to vector<2x768xbf16>
    %c0_1 = arith.constant 0 : index
    %c0_2 = arith.constant 0 : index
    %2 = vector.load %arg2[%c0_1, %c0_2] : memref<768x256xbf16, #tpu.memory_space<vmem>>, vector<768x256xbf16>
    %cst = arith.constant dense<0.000000e+00> : vector<2x256xf32>
    %3 = tpu.matmul %1, %2, %cst {dimension_numbers = #tpu.dot_dimension_numbers<[1], [0], [0], [1], [0, 0, 1, 1], [], []>} : vector<2x768xbf16>, vector<768x256xbf16>, vector<2x256xf32> -> vector<2x256xf32>
    %c0_3 = arith.constant 0 : index
    %c0_4 = arith.constant 0 : index
    %4 = vector.load %arg3[%c0_3, %c0_4] : memref<1x256xf32, #tpu.memory_space<vmem>>, vector<1x256xf32>
    %5 = vector.broadcast %4 : vector<1x256xf32> to vector<2x256xf32>
    %6 = arith.addf %3, %5 : vector<2x256xf32>
    %cst_5 = arith.constant 0.000000e+00 : f32
    %7 = vector.broadcast %cst_5 : f32 to vector<2x256xf32>
    %8 = arith.maximumf %6, %7 : vector<2x256xf32>
    %9 = arith.truncf %8 : vector<2x256xf32> to vector<2x256xbf16>
    %c0_6 = arith.constant 0 : index
    %c0_7 = arith.constant 0 : index
    %10 = vector.load %arg4[%c0_6, %c0_7] : memref<256x128xbf16, #tpu.memory_space<vmem>>, vector<256x128xbf16>
    %cst_8 = arith.constant dense<0.000000e+00> : vector<2x128xf32>
    %11 = tpu.matmul %9, %10, %cst_8 {dimension_numbers = #tpu.dot_dimension_numbers<[1], [0], [0], [1], [0, 0, 1, 1], [], []>} : vector<2x256xbf16>, vector<256x128xbf16>, vector<2x128xf32> -> vector<2x128xf32>
    %c0_9 = arith.constant 0 : index
    %c0_10 = arith.constant 0 : index
    %12 = vector.load %arg5[%c0_9, %c0_10] : memref<1x128xf32, #tpu.memory_space<vmem>>, vector<1x128xf32>
    %13 = vector.broadcast %12 : vector<1x128xf32> to vector<2x128xf32>
    %14 = arith.addf %11, %13 : vector<2x128xf32>
    %c0_11 = arith.constant 0 : index
    %c0_12 = arith.constant 0 : index
    %15 = vector.load %arg6[%c0_11, %c0_12] : memref<2x128xf32, #tpu.memory_space<vmem>>, vector<2x128xf32>
    tpu.vector_store %arg6[%c0_11, %c0_12], %14 {strides = array<i32>} : memref<2x128xf32, #tpu.memory_space<vmem>>, vector<2x128xf32>,
    return
  }
  func.func @transform_0(%arg0: i32) -> (i32, i32) {
    %c0_i32 = arith.constant 0 : i32
    %c0_i32_0 = arith.constant 0 : i32
    return %arg0, %c0_i32 : i32, i32
  }
  func.func @transform_1(%arg0: i32) -> (i32, i32) {
    %c0_i32 = arith.constant 0 : i32
    %c0_i32_0 = arith.constant 0 : i32
    %c0_i32_1 = arith.constant 0 : i32
    return %c0_i32, %c0_i32_0 : i32, i32
  }
  func.func @transform_2(%arg0: i32) -> (i32, i32) {
    %c0_i32 = arith.constant 0 : i32
    %c0_i32_0 = arith.constant 0 : i32
    %c0_i32_1 = arith.constant 0 : i32
    return %c0_i32, %c0_i32_0 : i32, i32
  }
  func.func @transform_3(%arg0: i32) -> (i32, i32) {
    %c0_i32 = arith.constant 0 : i32
    %c0_i32_0 = arith.constant 0 : i32
    %c0_i32_1 = arith.constant 0 : i32
    return %c0_i32, %c0_i32_0 : i32, i32
  }
  func.func @transform_4(%arg0: i32) -> (i32, i32) {
    %c0_i32 = arith.constant 0 : i32
    %c0_i32_0 = arith.constant 0 : i32
    %c0_i32_1 = arith.constant 0 : i32
    return %c0_i32, %c0_i32_0 : i32, i32
  }
  func.func @transform_5(%arg0: i32) -> (i32, i32) {
    %c0_i32 = arith.constant 0 : i32
    %c0_i32_0 = arith.constant 0 : i32
    return %arg0, %c0_i32 : i32, i32
  }
}

</mosaic_0001>

<llo_original>
// kernel: _forward.1
$region0: #{_forward.1}
  #allocation0 [shape = 'u32[]', space=smem, size = 0x4, offset = 0x4, fixed_abs, tag = 'smem constant byte address 0x4 - core index']
  #allocation1 [shape = 'u32[144,128]{1,0:T(1,128)}', space=vmem, size = 0x12000, scoped, tag = 'internal scratch']
  %s0 = inlined_call_operand.vmem [shape: f32[2,768], index: 0, kind: input, shape index: {}]
  %s1 = inlined_call_operand.vmem [shape: bf16[768,256], index: 1, kind: input, shape index: {}]
  %s2 = inlined_call_operand.vmem [shape: f32[1,256], index: 2, kind: input, shape index: {}]
  %s3 = inlined_call_operand.vmem [shape: bf16[256,128], index: 3, kind: input, shape index: {}]
  %s4 = inlined_call_operand.vmem [shape: f32[1,128], index: 4, kind: input, shape index: {}]
  %s5 = inlined_call_operand.hbm [shape: f32[2,128], index: 5, kind: output, shape index: {}]
  %s6 = sld [smem:[#allocation0]]
  $region30: #{_forward.1} parent=0
    _
  %s8 = ssub.s32 1, %s6
  %s9 = scalar_select 0, %s8, %s6
  $region1: #{_forward.1} parent=0
    #allocation2 [shape = 'u8[1024]{0}', space=vmem, size = 0x400, scoped, tag = 'output window, operand 0, single buffered']
    #allocation3 [shape = 's32[1]{0}', space=sflag, size = 0x4, scoped, tag = 'scoped memory for _forward.1']
    %10 = vsyncpa [#allocation3], 0
    // Predicated region
    $region2: #{_forward.1} parent=1 // pred_check
      _
    $region3: #{_forward.1} parent=1 // pred_check_branch
      %12 = sbr.rel (0) target = $region5
    $region4: #{_forward.1} parent=1 // pred_region
      _
    $region5: #{_forward.1} parent=1 // pred_fallthru
      _
    // Predicated region
    $region6: #{_forward.1} parent=1 // pred_check
      _
    $region7: #{_forward.1} parent=1 // pred_check_branch
      %14 = sbr.rel (0) target = $region9
    $region8: #{_forward.1} parent=1 // pred_region
      _
    $region9: #{_forward.1} parent=1 // pred_fallthru
      _
    // Predicated region
    $region10: #{_forward.1} parent=1 // pred_check
      _
    $region11: #{_forward.1} parent=1 // pred_check_branch
      %16 = sbr.rel (0) target = $region13
    $region12: #{_forward.1} parent=1 // pred_region
      _
    $region13: #{_forward.1} parent=1 // pred_fallthru
      _
    // Predicated region
    $region14: #{_forward.1} parent=1 // pred_check
      _
    $region15: #{_forward.1} parent=1 // pred_check_branch
      %18 = sbr.rel (0) target = $region17
    $region16: #{_forward.1} parent=1 // pred_region
      _
    $region17: #{_forward.1} parent=1 // pred_fallthru
      _
    // Predicated region
    $region18: #{_forward.1} parent=1 // pred_check
      _
    $region19: #{_forward.1} parent=1 // pred_check_branch
      %20 = sbr.rel (0) target = $region21
    $region20: #{_forward.1} parent=1 // pred_region
      _
    $region21: #{_forward.1} parent=1 // pred_fallthru
      _
    %v22 = vld [vmem:[%s0] sm:$0xff]
    %v23 = vld [vmem:[%s0 + $0x8] sm:$0xf]
    %v26 = vcombine.high %v22, %v22
    %v28 = vunpack.c.l.s4 1983009808
    %v29 = vunpack.c.0.s8 %v28
    %v30 = vlaneseq
    %v31 = vshrl.u32 %v30, 7
    %v32 = vsub.s32 %v29, %v31
    %v33 = vrot.slane %v22, %v32
    %v35 = vunpack.c.l.s4 1983009808
    %v36 = vunpack.c.0.s8 %v35
    %v37 = vlaneseq
    %v38 = vshrl.u32 %v37, 7
    %v39 = vsub.s32 %v36, %v38
    %v40 = vrot.slane %v26, %v39
    %v41 = vcombine.high %v33, %v33
    %v42 = vcombine.high %v40, %v40
    %v44 = vunpack.c.l.s4 1983009808
    %v45 = vunpack.c.0.s8 %v44
    %v46 = vlaneseq
    %v47 = vshrl.u32 %v46, 7
    %v48 = vsub.s32 %v45, %v47
    %v49 = vrot.slane %v23, %v48
    %v50 = vcombine.high %v49, %v49
    %v57 = vpack.c.bf16 %v33, %v33
    %v58 = vpack.c.bf16 %v41, %v41
    %v59 = vpack.c.bf16 %v40, %v40
    %v60 = vpack.c.bf16 %v42, %v42
    %v61 = vpack.c.bf16 %v49, %v49
    %v62 = vpack.c.bf16 %v50, %v50
    %v63 = vld [vmem:[%s1] sm:$0xff]
    %v64 = vld [vmem:[%s1 + $0x8] sm:$0xff]
    %v65 = vld [vmem:[%s1 + $0x10] sm:$0xff]
    %v66 = vld [vmem:[%s1 + $0x18] sm:$0xff]
    %v67 = vld [vmem:[%s1 + $0x20] sm:$0xff]
    %v68 = vld [vmem:[%s1 + $0x28] sm:$0xff]
    %v69 = vld [vmem:[%s1 + $0x30] sm:$0xff]
    %v70 = vld [vmem:[%s1 + $0x38] sm:$0xff]
    %v71 = vld [vmem:[%s1 + $0x40] sm:$0xff]
    %v72 = vld [vmem:[%s1 + $0x48] sm:$0xff]
    %v73 = vld [vmem:[%s1 + $0x50] sm:$0xff]
    %v74 = vld [vmem:[%s1 + $0x58] sm:$0xff]
    %v75 = vld [vmem:[%s1 + $0x60] sm:$0xff]
    %v76 = vld [vmem:[%s1 + $0x68] sm:$0xff]
    %v77 = vld [vmem:[%s1 + $0x70] sm:$0xff]
    %v78 = vld [vmem:[%s1 + $0x78] sm:$0xff]
    %v79 = vld [vmem:[%s1 + $0x80] sm:$0xff]
    %v80 = vld [vmem:[%s1 + $0x88] sm:$0xff]
    %v81 = vld [vmem:[%s1 + $0x90] sm:$0xff]
    %v82 = vld [vmem:[%s1 + $0x98] sm:$0xff]
    %v83 = vld [vmem:[%s1 + $0xa0] sm:$0xff]
    %v84 = vld [vmem:[%s1 + $0xa8] sm:$0xff]
    %v85 = vld [vmem:[%s1 + $0xb0] sm:$0xff]
    %v86 = vld [vmem:[%s1 + $0xb8] sm:$0xff]
    %v87 = vld [vmem:[%s1 + $0xc0] sm:$0xff]
    %v88 = vld [vmem:[%s1 + $0xc8] sm:$0xff]
    %v89 = vld [vmem:[%s1 + $0xd0] sm:$0xff]
    %v90 = vld [vmem:[%s1 + $0xd8] sm:$0xff]
    %v91 = vld [vmem:[%s1 + $0xe0] sm:$0xff]
    %v92 = vld [vmem:[%s1 + $0xe8] sm:$0xff]
    %v93 = vld [vmem:[%s1 + $0xf0] sm:$0xff]
    %v94 = vld [vmem:[%s1 + $0xf8] sm:$0xff]
    %v95 = vld [vmem:[%s1 + $0x100] sm:$0xff]
    %v96 = vld [vmem:[%s1 + $0x108] sm:$0xff]
    %v97 = vld [vmem:[%s1 + $0x110] sm:$0xff]
    %v98 = vld [vmem:[%s1 + $0x118] sm:$0xff]
    %v99 = vld [vmem:[%s1 + $0x120] sm:$0xff]
    %v100 = vld [vmem:[%s1 + $0x128] sm:$0xff]
    %v101 = vld [vmem:[%s1 + $0x130] sm:$0xff]
    %v102 = vld [vmem:[%s1 + $0x138] sm:$0xff]
    %v103 = vld [vmem:[%s1 + $0x140] sm:$0xff]
    %v104 = vld [vmem:[%s1 + $0x148] sm:$0xff]
    %v105 = vld [vmem:[%s1 + $0x150] sm:$0xff]
    %v106 = vld [vmem:[%s1 + $0x158] sm:$0xff]
    %v107 = vld [vmem:[%s1 + $0x160] sm:$0xff]
    %v108 = vld [vmem:[%s1 + $0x168] sm:$0xff]
    %v109 = vld [vmem:[%s1 + $0x170] sm:$0xff]
    %v110 = vld [vmem:[%s1 + $0x178] sm:$0xff]
    %v111 = vld [vmem:[%s1 + $0x180] sm:$0xff]
    %v112 = vld [vmem:[%s1 + $0x188] sm:$0xff]
    %v113 = vld [vmem:[%s1 + $0x190] sm:$0xff]
    %v114 = vld [vmem:[%s1 + $0x198] sm:$0xff]
    %v115 = vld [vmem:[%s1 + $0x1a0] sm:$0xff]
    %v116 = vld [vmem:[%s1 + $0x1a8] sm:$0xff]
    %v117 = vld [vmem:[%s1 + $0x1b0] sm:$0xff]
    %v118 = vld [vmem:[%s1 + $0x1b8] sm:$0xff]
    %v119 = vld [vmem:[%s1 + $0x1c0] sm:$0xff]
    %v120 = vld [vmem:[%s1 + $0x1c8] sm:$0xff]
    %v121 = vld [vmem:[%s1 + $0x1d0] sm:$0xff]
    %v122 = vld [vmem:[%s1 + $0x1d8] sm:$0xff]
    %v123 = vld [vmem:[%s1 + $0x1e0] sm:$0xff]
    %v124 = vld [vmem:[%s1 + $0x1e8] sm:$0xff]
    %v125 = vld [vmem:[%s1 + $0x1f0] sm:$0xff]
    %v126 = vld [vmem:[%s1 + $0x1f8] sm:$0xff]
    %v127 = vld [vmem:[%s1 + $0x200] sm:$0xff]
    %v128 = vld [vmem:[%s1 + $0x208] sm:$0xff]
    %v129 = vld [vmem:[%s1 + $0x210] sm:$0xff]
    %v130 = vld [vmem:[%s1 + $0x218] sm:$0xff]
    %v131 = vld [vmem:[%s1 + $0x220] sm:$0xff]
    %v132 = vld [vmem:[%s1 + $0x228] sm:$0xff]
    %v133 = vld [vmem:[%s1 + $0x230] sm:$0xff]
    %v134 = vld [vmem:[%s1 + $0x238] sm:$0xff]
    %v135 = vld [vmem:[%s1 + $0x240] sm:$0xff]
    %v136 = vld [vmem:[%s1 + $0x248] sm:$0xff]
    %v137 = vld [vmem:[%s1 + $0x250] sm:$0xff]
    %v138 = vld [vmem:[%s1 + $0x258] sm:$0xff]
    %v139 = vld [vmem:[%s1 + $0x260] sm:$0xff]
    %v140 = vld [vmem:[%s1 + $0x268] sm:$0xff]
    %v141 = vld [vmem:[%s1 + $0x270] sm:$0xff]
    %v142 = vld [vmem:[%s1 + $0x278] sm:$0xff]
    %v143 = vld [vmem:[%s1 + $0x280] sm:$0xff]
    %v144 = vld [vmem:[%s1 + $0x288] sm:$0xff]
    %v145 = vld [vmem:[%s1 + $0x290] sm:$0xff]
    %v146 = vld [vmem:[%s1 + $0x298] sm:$0xff]
    %v147 = vld [vmem:[%s1 + $0x2a0] sm:$0xff]
    %v148 = vld [vmem:[%s1 + $0x2a8] sm:$0xff]
    %v149 = vld [vmem:[%s1 + $0x2b0] sm:$0xff]
    %v150 = vld [vmem:[%s1 + $0x2b8] sm:$0xff]
    %v151 = vld [vmem:[%s1 + $0x2c0] sm:$0xff]
    %v152 = vld [vmem:[%s1 + $0x2c8] sm:$0xff]
    %v153 = vld [vmem:[%s1 + $0x2d0] sm:$0xff]
    %v154 = vld [vmem:[%s1 + $0x2d8] sm:$0xff]
    %v155 = vld [vmem:[%s1 + $0x2e0] sm:$0xff]
    %v156 = vld [vmem:[%s1 + $0x2e8] sm:$0xff]
    %v157 = vld [vmem:[%s1 + $0x2f0] sm:$0xff]
    %v158 = vld [vmem:[%s1 + $0x2f8] sm:$0xff]
    %v159 = vld [vmem:[%s2] sm:$0x3]
    %v161 = vlaneseq
    %v162 = vshrl.u32 %v161, 7
    %v163 = vsub.s32 0, %v162
    %v164 = vrot.slane %v159, %v163
    %v165 = vlaneseq
    %v166 = vshrl.u32 %v165, 7
    %v167 = vsub.s32 1, %v166
    %v168 = vrot.slane %v159, %v167
    %v267 = vunpack.c.l.b16 %v63
    %v268 = vunpack.c.h.b16 %v63
    %v269 = vunpack.c.l.b16 %v64
    %v270 = vunpack.c.h.b16 %v64
    %v271 = vunpack.c.l.b16 %v65
    %v272 = vunpack.c.h.b16 %v65
    %v273 = vunpack.c.l.b16 %v66
    %v274 = vunpack.c.h.b16 %v66
    %v275 = vunpack.c.l.b16 %v67
    %v276 = vunpack.c.h.b16 %v67
    %v277 = vunpack.c.l.b16 %v68
    %v278 = vunpack.c.h.b16 %v68
    %v279 = vunpack.c.l.b16 %v69
    %v280 = vunpack.c.h.b16 %v69
    %v281 = vunpack.c.l.b16 %v70
    %v282 = vunpack.c.h.b16 %v70
    %v283 = vunpack.c.l.b16 %v71
    %v284 = vunpack.c.h.b16 %v71
    %v285 = vunpack.c.l.b16 %v72
    %v286 = vunpack.c.h.b16 %v72
    %v287 = vunpack.c.l.b16 %v73
    %v288 = vunpack.c.h.b16 %v73
    %v289 = vunpack.c.l.b16 %v74
    %v290 = vunpack.c.h.b16 %v74
    %v291 = vunpack.c.l.b16 %v75
    %v292 = vunpack.c.h.b16 %v75
    %v293 = vunpack.c.l.b16 %v76
    %v294 = vunpack.c.h.b16 %v76
    %v295 = vunpack.c.l.b16 %v77
    %v296 = vunpack.c.h.b16 %v77
    %v297 = vunpack.c.l.b16 %v78
    %v298 = vunpack.c.h.b16 %v78
    %v299 = vunpack.c.l.b16 %v79
    %v300 = vunpack.c.h.b16 %v79
    %v301 = vunpack.c.l.b16 %v80
    %v302 = vunpack.c.h.b16 %v80
    %v303 = vunpack.c.l.b16 %v81
    %v304 = vunpack.c.h.b16 %v81
    %v305 = vunpack.c.l.b16 %v82
    %v306 = vunpack.c.h.b16 %v82
    %v307 = vunpack.c.l.b16 %v83
    %v308 = vunpack.c.h.b16 %v83
    %v309 = vunpack.c.l.b16 %v84
    %v310 = vunpack.c.h.b16 %v84
    %v311 = vunpack.c.l.b16 %v85
    %v312 = vunpack.c.h.b16 %v85
    %v313 = vunpack.c.l.b16 %v86
    %v314 = vunpack.c.h.b16 %v86
    %v315 = vunpack.c.l.b16 %v87
    %v316 = vunpack.c.h.b16 %v87
    %v317 = vunpack.c.l.b16 %v88
    %v318 = vunpack.c.h.b16 %v88
    %v319 = vunpack.c.l.b16 %v89
    %v320 = vunpack.c.h.b16 %v89
    %v321 = vunpack.c.l.b16 %v90
    %v322 = vunpack.c.h.b16 %v90
    %v323 = vunpack.c.l.b16 %v91
    %v324 = vunpack.c.h.b16 %v91
    %v325 = vunpack.c.l.b16 %v92
    %v326 = vunpack.c.h.b16 %v92
    %v327 = vunpack.c.l.b16 %v93
    %v328 = vunpack.c.h.b16 %v93
    %v329 = vunpack.c.l.b16 %v94
    %v330 = vunpack.c.h.b16 %v94
    %v331 = vunpack.c.l.b16 %v95
    %v332 = vunpack.c.h.b16 %v95
    %v333 = vunpack.c.l.b16 %v96
    %v334 = vunpack.c.h.b16 %v96
    %v335 = vunpack.c.l.b16 %v97
    %v336 = vunpack.c.h.b16 %v97
    %v337 = vunpack.c.l.b16 %v98
    %v338 = vunpack.c.h.b16 %v98
    %v339 = vunpack.c.l.b16 %v99
    %v340 = vunpack.c.h.b16 %v99
    %v341 = vunpack.c.l.b16 %v100
    %v342 = vunpack.c.h.b16 %v100
    %v343 = vunpack.c.l.b16 %v101
    %v344 = vunpack.c.h.b16 %v101
    %v345 = vunpack.c.l.b16 %v102
    %v346 = vunpack.c.h.b16 %v102
    %v347 = vunpack.c.l.b16 %v103
    %v348 = vunpack.c.h.b16 %v103
    %v349 = vunpack.c.l.b16 %v104
    %v350 = vunpack.c.h.b16 %v104
    %v351 = vunpack.c.l.b16 %v105
    %v352 = vunpack.c.h.b16 %v105
    %v353 = vunpack.c.l.b16 %v106
    %v354 = vunpack.c.h.b16 %v106
    %v355 = vunpack.c.l.b16 %v107
    %v356 = vunpack.c.h.b16 %v107
    %v357 = vunpack.c.l.b16 %v108
    %v358 = vunpack.c.h.b16 %v108
    %v359 = vunpack.c.l.b16 %v109
    %v360 = vunpack.c.h.b16 %v109
    %v361 = vunpack.c.l.b16 %v110
    %v362 = vunpack.c.h.b16 %v110
    %v363 = vunpack.c.l.b16 %v111
    %v364 = vunpack.c.h.b16 %v111
    %v365 = vunpack.c.l.b16 %v112
    %v366 = vunpack.c.h.b16 %v112
    %v367 = vunpack.c.l.b16 %v113
    %v368 = vunpack.c.h.b16 %v113
    %v369 = vunpack.c.l.b16 %v114
    %v370 = vunpack.c.h.b16 %v114
    %v371 = vunpack.c.l.b16 %v115
    %v372 = vunpack.c.h.b16 %v115
    %v373 = vunpack.c.l.b16 %v116
    %v374 = vunpack.c.h.b16 %v116
    %v375 = vunpack.c.l.b16 %v117
    %v376 = vunpack.c.h.b16 %v117
    %v377 = vunpack.c.l.b16 %v118
    %v378 = vunpack.c.h.b16 %v118
    %v379 = vunpack.c.l.b16 %v119
    %v380 = vunpack.c.h.b16 %v119
    %v381 = vunpack.c.l.b16 %v120
    %v382 = vunpack.c.h.b16 %v120
    %v383 = vunpack.c.l.b16 %v121
    %v384 = vunpack.c.h.b16 %v121
    %v385 = vunpack.c.l.b16 %v122
    %v386 = vunpack.c.h.b16 %v122
    %v387 = vunpack.c.l.b16 %v123
    %v388 = vunpack.c.h.b16 %v123
    %v389 = vunpack.c.l.b16 %v124
    %v390 = vunpack.c.h.b16 %v124
    %v391 = vunpack.c.l.b16 %v125
    %v392 = vunpack.c.h.b16 %v125
    %v393 = vunpack.c.l.b16 %v126
    %v394 = vunpack.c.h.b16 %v126
    %v395 = vunpack.c.l.b16 %v127
    %v396 = vunpack.c.h.b16 %v127
    %v397 = vunpack.c.l.b16 %v128
    %v398 = vunpack.c.h.b16 %v128
    %v399 = vunpack.c.l.b16 %v129
    %v400 = vunpack.c.h.b16 %v129
    %v401 = vunpack.c.l.b16 %v130
    %v402 = vunpack.c.h.b16 %v130
    %v403 = vunpack.c.l.b16 %v131
    %v404 = vunpack.c.h.b16 %v131
    %v405 = vunpack.c.l.b16 %v132
    %v406 = vunpack.c.h.b16 %v132
    %v407 = vunpack.c.l.b16 %v133
    %v408 = vunpack.c.h.b16 %v133
    %v409 = vunpack.c.l.b16 %v134
    %v410 = vunpack.c.h.b16 %v134
    %v411 = vunpack.c.l.b16 %v135
    %v412 = vunpack.c.h.b16 %v135
    %v413 = vunpack.c.l.b16 %v136
    %v414 = vunpack.c.h.b16 %v136
    %v415 = vunpack.c.l.b16 %v137
    %v416 = vunpack.c.h.b16 %v137
    %v417 = vunpack.c.l.b16 %v138
    %v418 = vunpack.c.h.b16 %v138
    %v419 = vunpack.c.l.b16 %v139
    %v420 = vunpack.c.h.b16 %v139
    %v421 = vunpack.c.l.b16 %v140
    %v422 = vunpack.c.h.b16 %v140
    %v423 = vunpack.c.l.b16 %v141
    %v424 = vunpack.c.h.b16 %v141
    %v425 = vunpack.c.l.b16 %v142
    %v426 = vunpack.c.h.b16 %v142
    %v427 = vunpack.c.l.b16 %v143
    %v428 = vunpack.c.h.b16 %v143
    %v429 = vunpack.c.l.b16 %v144
    %v430 = vunpack.c.h.b16 %v144
    %v431 = vunpack.c.l.b16 %v145
    %v432 = vunpack.c.h.b16 %v145
    %v433 = vunpack.c.l.b16 %v146
    %v434 = vunpack.c.h.b16 %v146
    %v435 = vunpack.c.l.b16 %v147
    %v436 = vunpack.c.h.b16 %v147
    %v437 = vunpack.c.l.b16 %v148
    %v438 = vunpack.c.h.b16 %v148
    %v439 = vunpack.c.l.b16 %v149
    %v440 = vunpack.c.h.b16 %v149
    %v441 = vunpack.c.l.b16 %v150
    %v442 = vunpack.c.h.b16 %v150
    %v443 = vunpack.c.l.b16 %v151
    %v444 = vunpack.c.h.b16 %v151
    %v445 = vunpack.c.l.b16 %v152
    %v446 = vunpack.c.h.b16 %v152
    %v447 = vunpack.c.l.b16 %v153
    %v448 = vunpack.c.h.b16 %v153
    %v449 = vunpack.c.l.b16 %v154
    %v450 = vunpack.c.h.b16 %v154
    %v451 = vunpack.c.l.b16 %v155
    %v452 = vunpack.c.h.b16 %v155
    %v453 = vunpack.c.l.b16 %v156
    %v454 = vunpack.c.h.b16 %v156
    %v455 = vunpack.c.l.b16 %v157
    %v456 = vunpack.c.h.b16 %v157
    %v457 = vunpack.c.l.b16 %v158
    %v458 = vunpack.c.h.b16 %v158
    %v459 = vpack.c.b16 %v269, %v267
    %v460 = vpack.c.b16 %v270, %v268
    %v461 = vpack.c.b16 %v273, %v271
    %v462 = vpack.c.b16 %v274, %v272
    %v463 = vpack.c.b16 %v277, %v275
    %v464 = vpack.c.b16 %v278, %v276
    %v465 = vpack.c.b16 %v281, %v279
    %v466 = vpack.c.b16 %v282, %v280
    %v467 = vpack.c.b16 %v285, %v283
    %v468 = vpack.c.b16 %v286, %v284
    %v469 = vpack.c.b16 %v289, %v287
    %v470 = vpack.c.b16 %v290, %v288
    %v471 = vpack.c.b16 %v293, %v291
    %v472 = vpack.c.b16 %v294, %v292
    %v473 = vpack.c.b16 %v297, %v295
    %v474 = vpack.c.b16 %v298, %v296
    %v475 = vpack.c.b16 %v301, %v299
    %v476 = vpack.c.b16 %v302, %v300
    %v477 = vpack.c.b16 %v305, %v303
    %v478 = vpack.c.b16 %v306, %v304
    %v479 = vpack.c.b16 %v309, %v307
    %v480 = vpack.c.b16 %v310, %v308
    %v481 = vpack.c.b16 %v313, %v311
    %v482 = vpack.c.b16 %v314, %v312
    %v483 = vpack.c.b16 %v317, %v315
    %v484 = vpack.c.b16 %v318, %v316
    %v485 = vpack.c.b16 %v321, %v319
    %v486 = vpack.c.b16 %v322, %v320
    %v487 = vpack.c.b16 %v325, %v323
    %v488 = vpack.c.b16 %v326, %v324
    %v489 = vpack.c.b16 %v329, %v327
    %v490 = vpack.c.b16 %v330, %v328
    %v491 = vpack.c.b16 %v333, %v331
    %v492 = vpack.c.b16 %v334, %v332
    %v493 = vpack.c.b16 %v337, %v335
    %v494 = vpack.c.b16 %v338, %v336
    %v495 = vpack.c.b16 %v341, %v339
    %v496 = vpack.c.b16 %v342, %v340
    %v497 = vpack.c.b16 %v345, %v343
    %v498 = vpack.c.b16 %v346, %v344
    %v499 = vpack.c.b16 %v349, %v347
    %v500 = vpack.c.b16 %v350, %v348
    %v501 = vpack.c.b16 %v353, %v351
    %v502 = vpack.c.b16 %v354, %v352
    %v503 = vpack.c.b16 %v357, %v355
    %v504 = vpack.c.b16 %v358, %v356
    %v505 = vpack.c.b16 %v361, %v359
    %v506 = vpack.c.b16 %v362, %v360
    %v507 = vpack.c.b16 %v365, %v363
    %v508 = vpack.c.b16 %v366, %v364
    %v509 = vpack.c.b16 %v369, %v367
    %v510 = vpack.c.b16 %v370, %v368
    %v511 = vpack.c.b16 %v373, %v371
    %v512 = vpack.c.b16 %v374, %v372
    %v513 = vpack.c.b16 %v377, %v375
    %v514 = vpack.c.b16 %v378, %v376
    %v515 = vpack.c.b16 %v381, %v379
    %v516 = vpack.c.b16 %v382, %v380
    %v517 = vpack.c.b16 %v385, %v383
    %v518 = vpack.c.b16 %v386, %v384
    %v519 = vpack.c.b16 %v389, %v387
    %v520 = vpack.c.b16 %v390, %v388
    %v521 = vpack.c.b16 %v393, %v391
    %v522 = vpack.c.b16 %v394, %v392
    %v523 = vpack.c.b16 %v397, %v395
    %v524 = vpack.c.b16 %v398, %v396
    %v525 = vpack.c.b16 %v401, %v399
    %v526 = vpack.c.b16 %v402, %v400
    %v527 = vpack.c.b16 %v405, %v403
    %v528 = vpack.c.b16 %v406, %v404
    %v529 = vpack.c.b16 %v409, %v407
    %v530 = vpack.c.b16 %v410, %v408
    %v531 = vpack.c.b16 %v413, %v411
    %v532 = vpack.c.b16 %v414, %v412
    %v533 = vpack.c.b16 %v417, %v415
    %v534 = vpack.c.b16 %v418, %v416
    %v535 = vpack.c.b16 %v421, %v419
    %v536 = vpack.c.b16 %v422, %v420
    %v537 = vpack.c.b16 %v425, %v423
    %v538 = vpack.c.b16 %v426, %v424
    %v539 = vpack.c.b16 %v429, %v427
    %v540 = vpack.c.b16 %v430, %v428
    %v541 = vpack.c.b16 %v433, %v431
    %v542 = vpack.c.b16 %v434, %v432
    %v543 = vpack.c.b16 %v437, %v435
    %v544 = vpack.c.b16 %v438, %v436
    %v545 = vpack.c.b16 %v441, %v439
    %v546 = vpack.c.b16 %v442, %v440
    %v547 = vpack.c.b16 %v445, %v443
    %v548 = vpack.c.b16 %v446, %v444
    %v549 = vpack.c.b16 %v449, %v447
    %v550 = vpack.c.b16 %v450, %v448
    %v551 = vpack.c.b16 %v453, %v451
    %v552 = vpack.c.b16 %v454, %v452
    %v553 = vpack.c.b16 %v457, %v455
    %v554 = vpack.c.b16 %v458, %v456
    %651 = vmatprep.subr.bf16.mxu0 %v460
    %652 = vmatpush1.bf16.msra.mxu0 %v459
    %653 = vmatprep.subr.bf16.mxu0 %v462
    %654 = vmatpush1.bf16.msra.mxu0 %v461
    %655 = vmatprep.subr.bf16.mxu0 %v464
    %656 = vmatpush1.bf16.msra.mxu0 %v463
    %657 = vmatprep.subr.bf16.mxu0 %v466
    %658 = vmatpush1.bf16.msra.mxu0 %v465
    %659 = vmatprep.subr.bf16.mxu0 %v468
    %660 = vmatpush1.bf16.msra.mxu0 %v467
    %661 = vmatprep.subr.bf16.mxu0 %v470
    %662 = vmatpush1.bf16.msra.mxu0 %v469
    %663 = vmatprep.subr.bf16.mxu0 %v472
    %664 = vmatpush1.bf16.msra.mxu0 %v471
    %665 = vmatprep.subr.bf16.mxu0 %v474
    %666 = vmatpush1.bf16.msra.mxu0 %v473
    %667 = vmatprep.subr.bf16.mxu0 %v476
    %668 = vmatpush1.bf16.msra.mxu0 %v475
    %669 = vmatprep.subr.bf16.mxu0 %v478
    %670 = vmatpush1.bf16.msra.mxu0 %v477
    %671 = vmatprep.subr.bf16.mxu0 %v480
    %672 = vmatpush1.bf16.msra.mxu0 %v479
    %673 = vmatprep.subr.bf16.mxu0 %v482
    %674 = vmatpush1.bf16.msra.mxu0 %v481
    %675 = vmatprep.subr.bf16.mxu0 %v484
    %676 = vmatpush1.bf16.msra.mxu0 %v483
    %677 = vmatprep.subr.bf16.mxu0 %v486
    %678 = vmatpush1.bf16.msra.mxu0 %v485
    %679 = vmatprep.subr.bf16.mxu0 %v488
    %680 = vmatpush1.bf16.msra.mxu0 %v487
    %681 = vmatprep.subr.bf16.mxu0 %v490
    %682 = vmatpush1.bf16.msra.mxu0 %v489
    %683 = vmatprep.mubr.bf16.mxu0 %v58
    %684 = vmatmul.mubr.bf16.gmra.mrb[0].mxu0 %v57
    %v685 = vpop.f32.mrb[0].mxu0
    %v686 = vadd.f32 %v164, %v685
    %v687 = vpop.f32.mrb[0].mxu0
    %v688 = vadd.f32 %v168, %v687
    %v689 = vpop.f32.mrb[0].mxu0
    %v690 = vpop.f32.mrb[0].mxu0
    %691 = vdwg.mxu0
    %692 = vmatprep.subr.bf16.mxu0 %v492
    %693 = vmatpush1.bf16.msra.mxu0 %v491
    %694 = vmatprep.subr.bf16.mxu0 %v494
    %695 = vmatpush1.bf16.msra.mxu0 %v493
    %696 = vmatprep.subr.bf16.mxu0 %v496
    %697 = vmatpush1.bf16.msra.mxu0 %v495
    %698 = vmatprep.subr.bf16.mxu0 %v498
    %699 = vmatpush1.bf16.msra.mxu0 %v497
    %700 = vmatprep.subr.bf16.mxu0 %v500
    %701 = vmatpush1.bf16.msra.mxu0 %v499
    %702 = vmatprep.subr.bf16.mxu0 %v502
    %703 = vmatpush1.bf16.msra.mxu0 %v501
    %704 = vmatprep.subr.bf16.mxu0 %v504
    %705 = vmatpush1.bf16.msra.mxu0 %v503
    %706 = vmatprep.subr.bf16.mxu0 %v506
    %707 = vmatpush1.bf16.msra.mxu0 %v505
    %708 = vmatprep.subr.bf16.mxu0 %v508
    %709 = vmatpush1.bf16.msra.mxu0 %v507
    %710 = vmatprep.subr.bf16.mxu0 %v510
    %711 = vmatpush1.bf16.msra.mxu0 %v509
    %712 = vmatprep.subr.bf16.mxu0 %v512
    %713 = vmatpush1.bf16.msra.mxu0 %v511
    %714 = vmatprep.subr.bf16.mxu0 %v514
    %715 = vmatpush1.bf16.msra.mxu0 %v513
    %716 = vmatprep.subr.bf16.mxu0 %v516
    %717 = vmatpush1.bf16.msra.mxu0 %v515
    %718 = vmatprep.subr.bf16.mxu0 %v518
    %719 = vmatpush1.bf16.msra.mxu0 %v517
    %720 = vmatprep.subr.bf16.mxu0 %v520
    %721 = vmatpush1.bf16.msra.mxu0 %v519
    %722 = vmatprep.subr.bf16.mxu0 %v522
    %723 = vmatpush1.bf16.msra.mxu0 %v521
    %724 = vmatprep.mubr.bf16.mxu0 %v60
    %725 = vmatmul.mubr.bf16.gmra.mrb[0].mxu0 %v59
    %v726 = vpop.f32.mrb[0].mxu0
    %v727 = vadd.f32 %v686, %v726
    %v728 = vpop.f32.mrb[0].mxu0
    %v729 = vadd.f32 %v688, %v728
    %v730 = vpop.f32.mrb[0].mxu0
    %v731 = vpop.f32.mrb[0].mxu0
    %732 = vdwg.mxu0
    %733 = vmatprep.subr.bf16.mxu0 %v524
    %734 = vmatpush1.bf16.msra.mxu0 %v523
    %735 = vmatprep.subr.bf16.mxu0 %v526
    %736 = vmatpush1.bf16.msra.mxu0 %v525
    %737 = vmatprep.subr.bf16.mxu0 %v528
    %738 = vmatpush1.bf16.msra.mxu0 %v527
    %739 = vmatprep.subr.bf16.mxu0 %v530
    %740 = vmatpush1.bf16.msra.mxu0 %v529
    %741 = vmatprep.subr.bf16.mxu0 %v532
    %742 = vmatpush1.bf16.msra.mxu0 %v531
    %743 = vmatprep.subr.bf16.mxu0 %v534
    %744 = vmatpush1.bf16.msra.mxu0 %v533
    %745 = vmatprep.subr.bf16.mxu0 %v536
    %746 = vmatpush1.bf16.msra.mxu0 %v535
    %747 = vmatprep.subr.bf16.mxu0 %v538
    %748 = vmatpush1.bf16.msra.mxu0 %v537
    %749 = vmatprep.subr.bf16.mxu0 %v540
    %750 = vmatpush1.bf16.msra.mxu0 %v539
    %751 = vmatprep.subr.bf16.mxu0 %v542
    %752 = vmatpush1.bf16.msra.mxu0 %v541
    %753 = vmatprep.subr.bf16.mxu0 %v544
    %754 = vmatpush1.bf16.msra.mxu0 %v543
    %755 = vmatprep.subr.bf16.mxu0 %v546
    %756 = vmatpush1.bf16.msra.mxu0 %v545
    %757 = vmatprep.subr.bf16.mxu0 %v548
    %758 = vmatpush1.bf16.msra.mxu0 %v547
    %759 = vmatprep.subr.bf16.mxu0 %v550
    %760 = vmatpush1.bf16.msra.mxu0 %v549
    %761 = vmatprep.subr.bf16.mxu0 %v552
    %762 = vmatpush1.bf16.msra.mxu0 %v551
    %763 = vmatprep.subr.bf16.mxu0 %v554
    %764 = vmatpush1.bf16.msra.mxu0 %v553
    %765 = vmatprep.mubr.bf16.mxu0 %v62
    %766 = vmatmul.mubr.bf16.gmra.mrb[0].mxu0 %v61
    %v767 = vpop.f32.mrb[0].mxu0
    %v768 = vadd.f32 %v727, %v767
    %v769 = vpop.f32.mrb[0].mxu0
    %v770 = vadd.f32 %v729, %v769
    %v771 = vpop.f32.mrb[0].mxu0
    %v772 = vpop.f32.mrb[0].mxu0
    %773 = vdwg.mxu0
    %v774 = vmax.f32 %v768, 0.0
    %v775 = vmax.f32 %v770, 0.0
    %v776 = vpack.c.bf16 %v774, %v774
    %v777 = vpack.c.bf16 %v775, %v775
    %v778 = vld [vmem:[%s3] sm:$0xf]
    %v779 = vld [vmem:[%s3 + $0x4] sm:$0xf]
    %v780 = vld [vmem:[%s3 + $0x8] sm:$0xf]
    %v781 = vld [vmem:[%s3 + $0xc] sm:$0xf]
    %v782 = vld [vmem:[%s3 + $0x10] sm:$0xf]
    %v783 = vld [vmem:[%s3 + $0x14] sm:$0xf]
    %v784 = vld [vmem:[%s3 + $0x18] sm:$0xf]
    %v785 = vld [vmem:[%s3 + $0x1c] sm:$0xf]
    %v786 = vld [vmem:[%s3 + $0x20] sm:$0xf]
    %v787 = vld [vmem:[%s3 + $0x24] sm:$0xf]
    %v788 = vld [vmem:[%s3 + $0x28] sm:$0xf]
    %v789 = vld [vmem:[%s3 + $0x2c] sm:$0xf]
    %v790 = vld [vmem:[%s3 + $0x30] sm:$0xf]
    %v791 = vld [vmem:[%s3 + $0x34] sm:$0xf]
    %v792 = vld [vmem:[%s3 + $0x38] sm:$0xf]
    %v793 = vld [vmem:[%s3 + $0x3c] sm:$0xf]
    %v794 = vld [vmem:[%s3 + $0x40] sm:$0xf]
    %v795 = vld [vmem:[%s3 + $0x44] sm:$0xf]
    %v796 = vld [vmem:[%s3 + $0x48] sm:$0xf]
    %v797 = vld [vmem:[%s3 + $0x4c] sm:$0xf]
    %v798 = vld [vmem:[%s3 + $0x50] sm:$0xf]
    %v799 = vld [vmem:[%s3 + $0x54] sm:$0xf]
    %v800 = vld [vmem:[%s3 + $0x58] sm:$0xf]
    %v801 = vld [vmem:[%s3 + $0x5c] sm:$0xf]
    %v802 = vld [vmem:[%s3 + $0x60] sm:$0xf]
    %v803 = vld [vmem:[%s3 + $0x64] sm:$0xf]
    %v804 = vld [vmem:[%s3 + $0x68] sm:$0xf]
    %v805 = vld [vmem:[%s3 + $0x6c] sm:$0xf]
    %v806 = vld [vmem:[%s3 + $0x70] sm:$0xf]
    %v807 = vld [vmem:[%s3 + $0x74] sm:$0xf]
    %v808 = vld [vmem:[%s3 + $0x78] sm:$0xf]
    %v809 = vld [vmem:[%s3 + $0x7c] sm:$0xf]
    %v810 = vld [vmem:[%s4] sm:$0x1]
    %v812 = vlaneseq
    %v813 = vshrl.u32 %v812, 7
    %v814 = vsub.s32 0, %v813
    %v815 = vrot.slane %v810, %v814
    %v849 = vunpack.c.l.b16 %v778
    %v850 = vunpack.c.l.b16 %v779
    %v851 = vunpack.c.l.b16 %v780
    %v852 = vunpack.c.l.b16 %v781
    %v853 = vunpack.c.l.b16 %v782
    %v854 = vunpack.c.l.b16 %v783
    %v855 = vunpack.c.l.b16 %v784
    %v856 = vunpack.c.l.b16 %v785
    %v857 = vunpack.c.l.b16 %v786
    %v858 = vunpack.c.l.b16 %v787
    %v859 = vunpack.c.l.b16 %v788
    %v860 = vunpack.c.l.b16 %v789
    %v861 = vunpack.c.l.b16 %v790
    %v862 = vunpack.c.l.b16 %v791
    %v863 = vunpack.c.l.b16 %v792
    %v864 = vunpack.c.l.b16 %v793
    %v865 = vunpack.c.l.b16 %v794
    %v866 = vunpack.c.l.b16 %v795
    %v867 = vunpack.c.l.b16 %v796
    %v868 = vunpack.c.l.b16 %v797
    %v869 = vunpack.c.l.b16 %v798
    %v870 = vunpack.c.l.b16 %v799
    %v871 = vunpack.c.l.b16 %v800
    %v872 = vunpack.c.l.b16 %v801
    %v873 = vunpack.c.l.b16 %v802
    %v874 = vunpack.c.l.b16 %v803
    %v875 = vunpack.c.l.b16 %v804
    %v876 = vunpack.c.l.b16 %v805
    %v877 = vunpack.c.l.b16 %v806
    %v878 = vunpack.c.l.b16 %v807
    %v879 = vunpack.c.l.b16 %v808
    %v880 = vunpack.c.l.b16 %v809
    %v881 = vpack.c.b16 %v850, %v849
    %v882 = vpack.c.b16 %v852, %v851
    %v883 = vpack.c.b16 %v854, %v853
    %v884 = vpack.c.b16 %v856, %v855
    %v885 = vpack.c.b16 %v858, %v857
    %v886 = vpack.c.b16 %v860, %v859
    %v887 = vpack.c.b16 %v862, %v861
    %v888 = vpack.c.b16 %v864, %v863
    %v889 = vpack.c.b16 %v866, %v865
    %v890 = vpack.c.b16 %v868, %v867
    %v891 = vpack.c.b16 %v870, %v869
    %v892 = vpack.c.b16 %v872, %v871
    %v893 = vpack.c.b16 %v874, %v873
    %v894 = vpack.c.b16 %v876, %v875
    %v895 = vpack.c.b16 %v878, %v877
    %v896 = vpack.c.b16 %v880, %v879
    %913 = vmatprep.subr.bf16.mxu0 0
    %914 = vmatpush1.bf16.msra.mxu0 %v881
    %915 = vmatprep.subr.bf16.mxu0 0
    %916 = vmatpush1.bf16.msra.mxu0 %v882
    %917 = vmatprep.subr.bf16.mxu0 0
    %918 = vmatpush1.bf16.msra.mxu0 %v883
    %919 = vmatprep.subr.bf16.mxu0 0
    %920 = vmatpush1.bf16.msra.mxu0 %v884
    %921 = vmatprep.subr.bf16.mxu0 0
    %922 = vmatpush1.bf16.msra.mxu0 %v885
    %923 = vmatprep.subr.bf16.mxu0 0
    %924 = vmatpush1.bf16.msra.mxu0 %v886
    %925 = vmatprep.subr.bf16.mxu0 0
    %926 = vmatpush1.bf16.msra.mxu0 %v887
    %927 = vmatprep.subr.bf16.mxu0 0
    %928 = vmatpush1.bf16.msra.mxu0 %v888
    %929 = vmatprep.subr.bf16.mxu0 0
    %930 = vmatpush1.bf16.msra.mxu0 %v889
    %931 = vmatprep.subr.bf16.mxu0 0
    %932 = vmatpush1.bf16.msra.mxu0 %v890
    %933 = vmatprep.subr.bf16.mxu0 0
    %934 = vmatpush1.bf16.msra.mxu0 %v891
    %935 = vmatprep.subr.bf16.mxu0 0
    %936 = vmatpush1.bf16.msra.mxu0 %v892
    %937 = vmatprep.subr.bf16.mxu0 0
    %938 = vmatpush1.bf16.msra.mxu0 %v893
    %939 = vmatprep.subr.bf16.mxu0 0
    %940 = vmatpush1.bf16.msra.mxu0 %v894
    %941 = vmatprep.subr.bf16.mxu0 0
    %942 = vmatpush1.bf16.msra.mxu0 %v895
    %943 = vmatprep.subr.bf16.mxu0 0
    %944 = vmatpush1.bf16.msra.mxu0 %v896
    %945 = vmatprep.mubr.bf16.mxu0 %v777
    %946 = vmatmul.mubr.bf16.gmra.mrb[0].mxu0 %v776
    %v947 = vpop.f32.mrb[0].mxu0
    %v948 = vadd.f32 %v815, %v947
    %v949 = vpop.f32.mrb[0].mxu0
    %v950 = vpop.f32.mrb[0].mxu0
    %v951 = vpop.f32.mrb[0].mxu0
    %952 = vdwg.mxu0
    %953 = vst [vmem:[#allocation2] sm:$0x3] %v948
    // Predicated region
    $region22: #{_forward.1} parent=1 // pred_check
      _
    $region23: #{_forward.1} parent=1 // pred_check_branch
      %955 = sbr.rel (0) target = $region25
    $region24: #{_forward.1} parent=1 // pred_region
      %s957 = ssub.s32 32, 32
      %958 = vsyncadd [#allocation3], %s957
      %s960 = sshll.u32 [#allocation2], 4
      %s961 = int_to_ptr.vmem [resolvable:$true] %s960
      %963 = dma.vmem_to_hbm [thread:$0]  %s961, 32, %s5, [#allocation3]
    $region25: #{_forward.1} parent=1 // pred_fallthru
      _
    // Predicated region
    $region26: #{_forward.1} parent=1 // pred_check
      _
    $region27: #{_forward.1} parent=1 // pred_check_branch
      %965 = sbr.rel (0) target = $region29
    $region28: #{_forward.1} parent=1 // pred_region
      %966 = dma.done [#allocation3], 32
    $region29: #{_forward.1} parent=1 // pred_fallthru
      _
    %967 = vsyncpa [#allocation3], 1

</llo_original>
